<compile_context>
chip_gen: v7x
topology: tpu7x:2x2x1
jax: 0.10.0
libtpu: 0.0.40
codegen_flags: <defaults>
</compile_context>

<pallas_src>
import math
from functools import partial

import jax
import jax.numpy as jnp
from jax.experimental import pallas as pl
from jax.experimental.pallas import tpu as pltpu


# ----------------------------------------------------------------------------
# Kernels
# ----------------------------------------------------------------------------
def _transform_kernel(x_ref, w_ref, scale_ref, o_ref):
    """o = ((x @ w) * scale)  cast to bf16 (prescaled source-feature stream)."""
    y = jnp.dot(x_ref[...], w_ref[...], preferred_element_type=jnp.float32)
    o_ref[...] = (y * scale_ref[...]).astype(o_ref.dtype)


def _aggregate_kernel(a_ref, s_ref, ndst_ref, *rest, apply_relu, fuse_w):
    """acc[i] += A[i,k] @ s[k]  (bf16 x bf16 MXU, f32 accumulate).

    Final-k epilogue: y = acc * norm_dst  (then optionally y @ W)  + b (+relu).
    """
    if fuse_w:
        w_ref, b_ref, o_ref, acc_ref = rest
    else:
        b_ref, o_ref, acc_ref = rest
        w_ref = None

    k = pl.program_id(1)

    @pl.when(k == 0)
    def _():
        acc_ref[...] = jnp.zeros_like(acc_ref)

    # Native bf16 MXU matmul; A is 0/1 so bf16 is exact, accumulate in f32.
    acc_ref[...] += jnp.dot(a_ref[...], s_ref[...],
                            preferred_element_type=jnp.float32)

    @pl.when(k == pl.num_programs(1) - 1)
    def _():
        y = acc_ref[...] * ndst_ref[...]
        if fuse_w:
            # Fused post-aggregation transform (once per row block, small).
            y = jnp.dot(y, w_ref[...], preferred_element_type=jnp.float32)
        y = y + b_ref[...]
        if apply_relu:
            y = jnp.maximum(y, 0.0)
        o_ref[...] = y.astype(o_ref.dtype)


# ----------------------------------------------------------------------------
# pallas_call builders
# ----------------------------------------------------------------------------
def _vmem_limit(block_bytes, scratch_bytes=0):
    # Tight request: double-buffered pipelined blocks + resident scratch +
    # small headroom.  Capped at 32 MiB so it also fits v7x (64 MiB physical).
    need = 2 * block_bytes + scratch_bytes + (2 << 20)
    return int(min(max(need, 4 << 20), 32 << 20))


def _transform(x, w, scale, *, bm):
    """s = (x @ w) * scale, emitted as bf16 (feeds the aggregation)."""
    n, fin = x.shape
    fout = w.shape[1]
    blk = (bm * fin + fin * fout + bm) * 4 + bm * fout * 2
    return pl.pallas_call(
        _transform_kernel,
        out_shape=jax.ShapeDtypeStruct((n, fout), jnp.bfloat16),
        grid_spec=pltpu.PrefetchScalarGridSpec(
            num_scalar_prefetch=0,
            grid=(n // bm,),
            in_specs=[
                pl.BlockSpec((bm, fin), lambda i: (i, 0)),
                pl.BlockSpec((fin, fout), lambda i: (0, 0)),
                pl.BlockSpec((bm, 1), lambda i: (i, 0)),   # src norm
            ],
            out_specs=pl.BlockSpec((bm, fout), lambda i: (i, 0)),
        ),
        compiler_params=pltpu.CompilerParams(
            dimension_semantics=("parallel",),
            vmem_limit_bytes=_vmem_limit(blk),
        ),
    )(x, w, scale)


def _aggregate(adj_bf16, s_bf16, norm, w, b, *, relu, bm, bk):
    """(A @ s) * norm_dst  [optionally  @ W]  + b  (+relu)."""
    n = adj_bf16.shape[0]
    fs = s_bf16.shape[1]
    fuse_w = w is not None
    fout = w.shape[1] if fuse_w else fs

    blk = (bm * bk + bk * fs) * 2 + (bm + fout + bm * fout) * 4
    if fuse_w:
        blk += fs * fout * 4
    scratch = bm * fs * 4

    in_specs = [
        pl.BlockSpec((bm, bk), lambda i, k: (i, k)),   # A tile (bf16)
        pl.BlockSpec((bk, fs), lambda i, k: (k, 0)),   # prescaled src feats (bf16)
        pl.BlockSpec((bm, 1), lambda i, k: (i, 0)),    # dst norm
    ]
    args = [adj_bf16, s_bf16, norm]
    if fuse_w:
        in_specs.append(pl.BlockSpec((fs, fout), lambda i, k: (0, 0)))  # W (resident)
        args.append(w)
    in_specs.append(pl.BlockSpec((1, fout), lambda i, k: (0, 0)))       # bias
    args.append(b)

    return pl.pallas_call(
        partial(_aggregate_kernel, apply_relu=relu, fuse_w=fuse_w),
        out_shape=jax.ShapeDtypeStruct((n, fout), jnp.float32),
        grid_spec=pltpu.PrefetchScalarGridSpec(
            num_scalar_prefetch=0,
            grid=(n // bm, n // bk),
            in_specs=in_specs,
            out_specs=pl.BlockSpec((bm, fout), lambda i, k: (i, 0)),
            scratch_shapes=[pltpu.VMEM((bm, fs), jnp.float32)],
        ),
        compiler_params=pltpu.CompilerParams(
            dimension_semantics=("parallel", "arbitrary"),
            vmem_limit_bytes=_vmem_limit(blk, scratch),
        ),
    )(*args)


# ----------------------------------------------------------------------------
# GCN layers / forward
# ----------------------------------------------------------------------------
def _gcn_layer(adj_p, feats, norm_p, w_p, b_p, *, true_fin, true_fout,
               relu, bm, bk):
    if true_fin >= true_fout:
        # Transform first: O(N^2) aggregation runs at width fout (<= fin).
        # Src-side norm fused into the transform epilogue; bf16 s-stream.
        s = _transform(feats, w_p, norm_p, bm=bm)
        return _aggregate(adj_p, s, norm_p, None, b_p, relu=relu, bm=bm, bk=bk)
    # Aggregate first: single wrapper prescale (src norm, bf16); the
    # post-aggregation transform (+bias,+relu) is fused into the final-k
    # epilogue of the aggregation kernel (no N x F_in HBM round trip).
    s = (feats * norm_p).astype(jnp.bfloat16)
    return _aggregate(adj_p, s, norm_p, w_p, b_p, relu=relu, bm=bm, bk=bk)


def _round_up(x, m):
    return (x + m - 1) // m * m


def _pad2(a, rows, cols):
    return jnp.pad(a, ((0, rows - a.shape[0]), (0, cols - a.shape[1])))


def _pick_tiles(n, bm_req, bk_req):
    n128 = _round_up(n, 128)

    def pick(req):
        for t in (512, 256, 128):
            if t <= req and t <= n128:
                return t
        return 128

    bm, bk = pick(bm_req), pick(bk_req)
    # v7x megacore: keep at least 2 row-blocks so the 'parallel' grid axis 0
    # shards across both TensorCores.
    while bm > 128 and n128 // bm < 2:
        bm //= 2
    n_p = _round_up(n, max(bm, bk))
    return bm, bk, n_p


def gcn_forward(adj, x, w1, b1, w2, b2, *, bm=512, bk=512):
    """2-layer GraphConv forward on a dense adjacency matrix."""
    n, in_feats = x.shape
    h_feats = w1.shape[1]
    num_classes = w2.shape[1]

    bm, bk, n_p = _pick_tiles(n, bm, bk)

    # norm = clamp(deg,1)^-0.5 precomputed once from the un-padded adjacency.
    deg = jnp.sum(adj.astype(jnp.float32), axis=1, keepdims=True)
    norm = jax.lax.rsqrt(jnp.maximum(deg, 1.0))

    # Feature dims padded to multiples of 128 (lane-dense MXU, unmasked stores).
    fi = _round_up(in_feats, 128)
    fh = _round_up(h_feats, 128)
    fc = _round_up(num_classes, 128)

    # Pad adjacency directly in bf16 (0/1 exact) -- no f32 N^2 intermediate.
    adj_p = _pad2(adj.astype(jnp.bfloat16), n_p, n_p)
    x_p = _pad2(x.astype(jnp.float32), n_p, fi)
    norm_p = jnp.pad(norm, ((0, n_p - n), (0, 0)), constant_values=1.0)
    w1_p = _pad2(w1.astype(jnp.float32), fi, fh)
    b1_p = _pad2(b1.astype(jnp.float32).reshape(1, -1), 1, fh)
    w2_p = _pad2(w2.astype(jnp.float32), fh, fc)
    b2_p = _pad2(b2.astype(jnp.float32).reshape(1, -1), 1, fc)

    # Association decided on TRUE feature dims (not padded ones).
    h = _gcn_layer(adj_p, x_p, norm_p, w1_p, b1_p,
                   true_fin=in_feats, true_fout=h_feats,
                   relu=True, bm=bm, bk=bk)
    out = _gcn_layer(adj_p, h, norm_p, w2_p, b2_p,
                     true_fin=h_feats, true_fout=num_classes,
                     relu=False, bm=bm, bk=bk)
    return out[:n, :num_classes]


def reference_gcn(adj, x, w1, b1, w2, b2):
    deg = jnp.sum(adj, axis=1, keepdims=True)
    norm = jax.lax.rsqrt(jnp.maximum(deg, 1.0))
    h = ((adj @ (x * norm)) * norm) @ w1 + b1
    h = jnp.maximum(h, 0.0)
    out = ((adj @ (h * norm)) * norm) @ w2 + b2
    return out


if __name__ == "__main__":
    # Small synthetic graph.  Dims chosen so layer 1 exercises the fused
    # aggregate-first path (8 -> 256) and layer 2 the transform-first path
    # (256 -> 4).
    N, in_feats, h_feats, num_classes = 256, 8, 256, 4

    key = jax.random.PRNGKey(0)
    k_adj, k_x, k_w1, k_b1, k_w2, k_b2 = jax.random.split(key, 6)

    upper = (jax.random.uniform(k_adj, (N, N)) < 0.05).astype(jnp.float32)
    adj = jnp.triu(upper, 1)
    adj = adj + adj.T  # symmetric, zero diagonal

    x = jax.random.normal(k_x, (N, in_feats), dtype=jnp.float32)
    w1 = jax.random.normal(k_w1, (in_feats, h_feats), dtype=jnp.float32) / jnp.sqrt(in_feats)
    b1 = 0.1 * jax.random.normal(k_b1, (1, h_feats), dtype=jnp.float32)
    w2 = jax.random.normal(k_w2, (h_feats, num_classes), dtype=jnp.float32) / jnp.sqrt(h_feats)
    b2 = 0.1 * jax.random.normal(k_b2, (1, num_classes), dtype=jnp.float32)

    out = jax.block_until_ready(gcn_forward(adj, x, w1, b1, w2, b2))
    ref = reference_gcn(adj, x, w1, b1, w2, b2)

    assert out.shape == (N, num_classes)
    err = float(jnp.max(jnp.abs(out - ref)))
    # Source-feature stream is bf16 (per perf review); tolerance sized for that.
    assert jnp.allclose(out, ref, atol=2e-2, rtol=2e-2), f"max abs err {err}"

    print("KERNEL_OK")
</pallas_src>

<mosaic_0001>
module attributes {stable_mosaic.version = 11 : i64} {
  func.func @_aggregate_kernel(%arg0: i32, %arg1: i32, %arg2: memref<128x256xbf16, #tpu.memory_space<vmem>>, %arg3: memref<256x128xbf16, #tpu.memory_space<vmem>>, %arg4: memref<128x1xf32, #tpu.memory_space<vmem>>, %arg5: memref<128x256xf32, #tpu.memory_space<vmem>>, %arg6: memref<1x256xf32, #tpu.memory_space<vmem>>, %arg7: memref<128x256xf32, #tpu.memory_space<vmem>>, %arg8: memref<128x128xf32, #tpu.memory_space<vmem>>) attributes {dimension_semantics = [#tpu.dimension_semantics<parallel>, #tpu.dimension_semantics<arbitrary>], iteration_bounds = array<i64: 2, 1>, scalar_prefetch = 0 : i64, scratch_operands = 1 : i64, tpu.core_type = #tpu.core_type<tc>, window_params = [{transform_indices = @transform_0, window_bounds = array<i64: 128, 256>}, {transform_indices = @transform_1, window_bounds = array<i64: 256, 128>}, {transform_indices = @transform_2, window_bounds = array<i64: 128, 1>}, {pipeline_mode = #tpu.pipeline_mode<synchronous>, transform_indices = @transform_3, window_bounds = array<i64: 128, 256>}, {pipeline_mode = #tpu.pipeline_mode<synchronous>, transform_indices = @transform_4, window_bounds = array<i64: 1, 256>}, {transform_indices = @transform_5, window_bounds = array<i64: 128, 256>}]} {
    %c0_i32 = arith.constant 0 : i32
    %0 = arith.cmpi eq, %arg1, %c0_i32 : i32
    %1 = arith.extui %0 : i1 to i32
    %c0_i32_0 = arith.constant 0 : i32
    %2 = arith.cmpi ne, %1, %c0_i32_0 : i32
    scf.if %2 {
      %cst_10 = arith.constant 0.000000e+00 : f32
      %12 = vector.broadcast %cst_10 : f32 to vector<128x128xf32>
      %c0_11 = arith.constant 0 : index
      %c0_12 = arith.constant 0 : index
      %13 = vector.load %arg8[%c0_11, %c0_12] : memref<128x128xf32, #tpu.memory_space<vmem>>, vector<128x128xf32>
      tpu.vector_store %arg8[%c0_11, %c0_12], %12 {strides = array<i32>} : memref<128x128xf32, #tpu.memory_space<vmem>>, vector<128x128xf32>,
    } else {
    }
    %c0 = arith.constant 0 : index
    %c0_1 = arith.constant 0 : index
    %3 = vector.load %arg8[%c0, %c0_1] : memref<128x128xf32, #tpu.memory_space<vmem>>, vector<128x128xf32>
    %c0_2 = arith.constant 0 : index
    %c0_3 = arith.constant 0 : index
    %4 = vector.load %arg2[%c0_2, %c0_3] : memref<128x256xbf16, #tpu.memory_space<vmem>>, vector<128x256xbf16>
    %c0_4 = arith.constant 0 : index
    %c0_5 = arith.constant 0 : index
    %5 = vector.load %arg3[%c0_4, %c0_5] : memref<256x128xbf16, #tpu.memory_space<vmem>>, vector<256x128xbf16>
    %cst = arith.constant dense<0.000000e+00> : vector<128x128xf32>
    %6 = tpu.matmul %4, %5, %cst {dimension_numbers = #tpu.dot_dimension_numbers<[1], [0], [0], [1], [0, 0, 1, 1], [], []>} : vector<128x256xbf16>, vector<256x128xbf16>, vector<128x128xf32> -> vector<128x128xf32>
    %7 = arith.addf %3, %6 : vector<128x128xf32>
    %c0_6 = arith.constant 0 : index
    %c0_7 = arith.constant 0 : index
    %8 = vector.load %arg8[%c0_6, %c0_7] : memref<128x128xf32, #tpu.memory_space<vmem>>, vector<128x128xf32>
    tpu.vector_store %arg8[%c0_6, %c0_7], %7 {strides = array<i32>} : memref<128x128xf32, #tpu.memory_space<vmem>>, vector<128x128xf32>,
    %c0_i32_8 = arith.constant 0 : i32
    %9 = arith.cmpi eq, %arg1, %c0_i32_8 : i32
    %10 = arith.extui %9 : i1 to i32
    %c0_i32_9 = arith.constant 0 : i32
    %11 = arith.cmpi ne, %10, %c0_i32_9 : i32
    scf.if %11 {
      %c0_10 = arith.constant 0 : index
      %c0_11 = arith.constant 0 : index
      %12 = vector.load %arg8[%c0_10, %c0_11] : memref<128x128xf32, #tpu.memory_space<vmem>>, vector<128x128xf32>
      %c0_12 = arith.constant 0 : index
      %c0_13 = arith.constant 0 : index
      %13 = vector.load %arg4[%c0_12, %c0_13] : memref<128x1xf32, #tpu.memory_space<vmem>>, vector<128x1xf32>
      %14 = vector.broadcast %13 : vector<128x1xf32> to vector<128x128xf32>
      %15 = arith.mulf %12, %14 : vector<128x128xf32>
      %c0_14 = arith.constant 0 : index
      %c0_15 = arith.constant 0 : index
      %16 = vector.load %arg5[%c0_14, %c0_15] : memref<128x256xf32, #tpu.memory_space<vmem>>, vector<128x256xf32>
      %cst_16 = arith.constant dense<0.000000e+00> : vector<128x256xf32>
      %17 = tpu.matmul %15, %16, %cst_16 {dimension_numbers = #tpu.dot_dimension_numbers<[1], [0], [0], [1], [0, 0, 1, 1], [], []>} : vector<128x128xf32>, vector<128x256xf32>, vector<128x256xf32> -> vector<128x256xf32>
      %c0_17 = arith.constant 0 : index
      %c0_18 = arith.constant 0 : index
      %18 = vector.load %arg6[%c0_17, %c0_18] : memref<1x256xf32, #tpu.memory_space<vmem>>, vector<1x256xf32>
      %19 = vector.broadcast %18 : vector<1x256xf32> to vector<128x256xf32>
      %20 = arith.addf %17, %19 : vector<128x256xf32>
      %cst_19 = arith.constant 0.000000e+00 : f32
      %21 = vector.broadcast %cst_19 : f32 to vector<128x256xf32>
      %22 = arith.maximumf %20, %21 : vector<128x256xf32>
      %c0_20 = arith.constant 0 : index
      %c0_21 = arith.constant 0 : index
      %23 = vector.load %arg7[%c0_20, %c0_21] : memref<128x256xf32, #tpu.memory_space<vmem>>, vector<128x256xf32>
      tpu.vector_store %arg7[%c0_20, %c0_21], %22 {strides = array<i32>} : memref<128x256xf32, #tpu.memory_space<vmem>>, vector<128x256xf32>,
    } else {
    }
    return
  }
  func.func @transform_0(%arg0: i32, %arg1: i32) -> (i32, i32) {
    %c0_i32 = arith.constant 0 : i32
    return %arg0, %arg1 : i32, i32
  }
  func.func @transform_1(%arg0: i32, %arg1: i32) -> (i32, i32) {
    %c0_i32 = arith.constant 0 : i32
    %c0_i32_0 = arith.constant 0 : i32
    return %arg1, %c0_i32 : i32, i32
  }
  func.func @transform_2(%arg0: i32, %arg1: i32) -> (i32, i32) {
    %c0_i32 = arith.constant 0 : i32
    %c0_i32_0 = arith.constant 0 : i32
    return %arg0, %c0_i32 : i32, i32
  }
  func.func @transform_3(%arg0: i32, %arg1: i32) -> (i32, i32) {
    %c0_i32 = arith.constant 0 : i32
    %c0_i32_0 = arith.constant 0 : i32
    %c0_i32_1 = arith.constant 0 : i32
    return %c0_i32, %c0_i32_0 : i32, i32
  }
  func.func @transform_4(%arg0: i32, %arg1: i32) -> (i32, i32) {
    %c0_i32 = arith.constant 0 : i32
    %c0_i32_0 = arith.constant 0 : i32
    %c0_i32_1 = arith.constant 0 : i32
    return %c0_i32, %c0_i32_0 : i32, i32
  }
  func.func @transform_5(%arg0: i32, %arg1: i32) -> (i32, i32) {
    %c0_i32 = arith.constant 0 : i32
    %c0_i32_0 = arith.constant 0 : i32
    return %arg0, %c0_i32 : i32, i32
  }
}

</mosaic_0001>

<llo_original>
// kernel: tpu_custom_call.1
$region0: #{tpu_custom_call.1}
  #allocation0 [shape = 'u32[]', space=smem, size = 0x4, offset = 0x4, fixed_abs, tag = 'smem constant byte address 0x4 - core index']
  #allocation1 [shape = 'u32[144,128]{1,0:T(1,128)}', space=vmem, size = 0x12000, scoped, tag = 'internal scratch']
  #allocation2 [shape = 'f32[128,128]{1,0:T(8,128)}', space=vmem, size = 0x10000, scoped, tag = 'scratch operand']
  %s0 = inlined_call_operand.vmem [shape: bf16[256,256], index: 0, kind: input, shape index: {}]
  %s1 = inlined_call_operand.hbm [shape: bf16[256,128], index: 1, kind: input, shape index: {}]
  %s2 = inlined_call_operand.vmem [shape: f32[256,1], index: 2, kind: input, shape index: {}]
  %s3 = inlined_call_operand.hbm [shape: f32[128,256], index: 3, kind: input, shape index: {}]
  %s4 = inlined_call_operand.vmem [shape: f32[1,256], index: 4, kind: input, shape index: {}]
  %s5 = inlined_call_operand.hbm [shape: f32[256,256], index: 5, kind: output, shape index: {}]
  %s6 = sld [smem:[#allocation0]]
  $region69: #{tpu_custom_call.1} parent=0
    _
  %s8 = ssub.s32 1, %s6
  %s9 = scalar_select 0, %s8, %s6
  $region1: #{tpu_custom_call.1} parent=0
    #allocation3 [shape = 'u8[65536]{0}', space=vmem, size = 0x10000, scoped, tag = 'input window, operand 1, single buffered']
    #allocation4 [shape = 's32[2]{0}', space=sflag, size = 0x8, scoped, tag = 'scoped memory for tpu_custom_call.1']
    #allocation5 [shape = 's32[2]{0}', space=sflag, size = 0x8, scoped, tag = 'scoped memory for tpu_custom_call.1']
    #allocation6 [shape = 'u8[131072]{0}', space=vmem, size = 0x20000, scoped, tag = 'input window, operand 3, single buffered']
    #allocation7 [shape = 's32[1]{0}', space=sflag, size = 0x4, scoped, tag = 'scoped memory for tpu_custom_call.1']
    #allocation8 [shape = 'u8[262144]{0}', space=vmem, size = 0x40000, scoped, tag = 'output window, operand 0']
    %10 = vsyncpa [#allocation4], 0
    %11 = vsyncpa [#allocation7], 0
    %12 = vsyncpa [#allocation5], 0
    %s13 = scalar_lea.sflag [#allocation5], 1
    %14 = vsyncpa %s13, 0
    loop: start=0, step=1, limit=4
    $region2: #{tpu_custom_call.1} parent=1 // loop_pre_header
      _
    $region3: #{tpu_custom_call.1} parent=1 // loop_header
      %s16 = sphi 0, %s20
      %p17 = scmp.ge.s32.totalorder %s16, 4
      %s23 = sphi 0, %s35
      %s24 = sphi 0, %s31
      %s25 = sphi 0, %s23
      %s26 = sphi 0, %s24
      %s27 = sphi 0, %s25
      %s28 = sphi 0, %s26
      %s40 = sphi 0, %s42
      %s43 = sphi 0, %s40
      %s44 = sphi 0, %s43
      %s60 = sphi 0, %s44
      %s66 = sphi 0, %s68
      %s69 = sphi 0, %s66
      %s70 = sphi 0, %s69
      %s86 = sphi 0, %s70
      %s92 = sphi 0, %s94
      %s95 = sphi 0, %s92
      %s96 = sphi 0, %s95
      %s112 = sphi 0, %s96
      %s116 = sphi 0, %s116
      %s118 = sphi 0, %s116
      %s119 = sphi 0, %s118
      %s133 = sphi 0, %s119
      %s137 = sphi 0, %s137
      %s139 = sphi 0, %s137
      %s140 = sphi 0, %s139
      %s154 = sphi 0, %s140
      %s160 = sphi 0, %s162
      %s163 = sphi 0, %s160
      %s164 = sphi 0, %s163
      %s180 = sphi 0, %s164
    $region4: #{tpu_custom_call.1} parent=1 // loop_header_branch
      %19 = sbr.rel (%p17) target = $region8
    $region5: #{tpu_custom_call.1} parent=1 // loop_body
      %s21 = ssub.s32 %s16, 1
      %s22 = ssub.s32 %s16, 2
      %s29 = sadd.s32 1, %s24
      %p30 = scmp.ge.s32.totalorder %s29, 1
      %s31 = scalar_select %p30, 0, %s29
      %s32 = sadd.s32 1, %s23
      %s33 = scalar_select %p30, %s32, %s23
      %p34 = scmp.ge.s32.totalorder %s33, 2
      %s35 = scalar_select %p34, 0, %s33
      %s36 = ssub.s32 %s23, %s35
      %s37 = ssub.s32 %s24, %s31
      %s38 = sor.u32 %s36, %s37
      %p39 = scmp.eq.s32.totalorder %s38, 0
      %s41 = sadd.s32 %s40, 1
      %s42 = scalar_select %p39, %s40, %s41
      %p45 = pneg %p39
      %p46 = scmp.eq.s32.totalorder %s16, 1
      %p47 = por %p45, %p46
      %p48 = scmp.ne.s32.totalorder %s40, %s43
      %p49 = scmp.eq.s32.totalorder %s16, 0
      %p50 = por %p48, %p49
      %p51 = scmp.ne.s32.totalorder %s40, %s43
      %p52 = scmp.eq.s32.totalorder %s21, 1
      %p53 = por %p51, %p52
      %p54 = scmp.ne.s32.totalorder %s43, %s44
      %p55 = scmp.eq.s32.totalorder %s21, 0
      %p56 = por %p54, %p55
      %p57 = scmp.ne.s32.totalorder %s43, %s44
      %p58 = scmp.eq.s32.totalorder %s22, 1
      %p59 = por %p57, %p58
      %p61 = scmp.ne.s32.totalorder %s44, %s60
      %p62 = scmp.eq.s32.totalorder %s22, 0
      %p63 = por %p61, %p62
      %s64 = ssub.s32 %s24, %s31
      %p65 = scmp.eq.s32.totalorder %s64, 0
      %s67 = sadd.s32 %s66, 1
      %s68 = scalar_select %p65, %s66, %s67
      %p71 = pneg %p65
      %p72 = scmp.eq.s32.totalorder %s16, 1
      %p73 = por %p71, %p72
      %p74 = scmp.ne.s32.totalorder %s66, %s69
      %p75 = scmp.eq.s32.totalorder %s16, 0
      %p76 = por %p74, %p75
      %p77 = scmp.ne.s32.totalorder %s66, %s69
      %p78 = scmp.eq.s32.totalorder %s21, 1
      %p79 = por %p77, %p78
      %p80 = scmp.ne.s32.totalorder %s69, %s70
      %p81 = scmp.eq.s32.totalorder %s21, 0
      %p82 = por %p80, %p81
      %p83 = scmp.ne.s32.totalorder %s69, %s70
      %p84 = scmp.eq.s32.totalorder %s22, 1
      %p85 = por %p83, %p84
      %p87 = scmp.ne.s32.totalorder %s70, %s86
      %p88 = scmp.eq.s32.totalorder %s22, 0
      %p89 = por %p87, %p88
      %s90 = ssub.s32 %s23, %s35
      %p91 = scmp.eq.s32.totalorder %s90, 0
      %s93 = sadd.s32 %s92, 1
      %s94 = scalar_select %p91, %s92, %s93
      %p97 = pneg %p91
      %p98 = scmp.eq.s32.totalorder %s16, 1
      %p99 = por %p97, %p98
      %p100 = scmp.ne.s32.totalorder %s92, %s95
      %p101 = scmp.eq.s32.totalorder %s16, 0
      %p102 = por %p100, %p101
      %p103 = scmp.ne.s32.totalorder %s92, %s95
      %p104 = scmp.eq.s32.totalorder %s21, 1
      %p105 = por %p103, %p104
      %p106 = scmp.ne.s32.totalorder %s95, %s96
      %p107 = scmp.eq.s32.totalorder %s21, 0
      %p108 = por %p106, %p107
      %p109 = scmp.ne.s32.totalorder %s95, %s96
      %p110 = scmp.eq.s32.totalorder %s22, 1
      %p111 = por %p109, %p110
      %p113 = scmp.ne.s32.totalorder %s96, %s112
      %p114 = scmp.eq.s32.totalorder %s22, 0
      %p115 = por %p113, %p114
      %s117 = sadd.s32 %s116, 1
      %p120 = scmp.eq.s32.totalorder %s16, 1
      %p121 = scmp.ne.s32.totalorder %s116, %s118
      %p122 = scmp.eq.s32.totalorder %s16, 0
      %p123 = por %p121, %p122
      %p124 = scmp.ne.s32.totalorder %s116, %s118
      %p125 = scmp.eq.s32.totalorder %s21, 1
      %p126 = por %p124, %p125
      %p127 = scmp.ne.s32.totalorder %s118, %s119
      %p128 = scmp.eq.s32.totalorder %s21, 0
      %p129 = por %p127, %p128
      %p130 = scmp.ne.s32.totalorder %s118, %s119
      %p131 = scmp.eq.s32.totalorder %s22, 1
      %p132 = por %p130, %p131
      %p134 = scmp.ne.s32.totalorder %s119, %s133
      %p135 = scmp.eq.s32.totalorder %s22, 0
      %p136 = por %p134, %p135
      %s138 = sadd.s32 %s137, 1
      %p141 = scmp.eq.s32.totalorder %s16, 1
      %p142 = scmp.ne.s32.totalorder %s137, %s139
      %p143 = scmp.eq.s32.totalorder %s16, 0
      %p144 = por %p142, %p143
      %p145 = scmp.ne.s32.totalorder %s137, %s139
      %p146 = scmp.eq.s32.totalorder %s21, 1
      %p147 = por %p145, %p146
      %p148 = scmp.ne.s32.totalorder %s139, %s140
      %p149 = scmp.eq.s32.totalorder %s21, 0
      %p150 = por %p148, %p149
      %p151 = scmp.ne.s32.totalorder %s139, %s140
      %p152 = scmp.eq.s32.totalorder %s22, 1
      %p153 = por %p151, %p152
      %p155 = scmp.ne.s32.totalorder %s140, %s154
      %p156 = scmp.eq.s32.totalorder %s22, 0
      %p157 = por %p155, %p156
      %s158 = ssub.s32 %s23, %s35
      %p159 = scmp.eq.s32.totalorder %s158, 0
      %s161 = sadd.s32 %s160, 1
      %s162 = scalar_select %p159, %s160, %s161
      %p165 = pneg %p159
      %p166 = scmp.eq.s32.totalorder %s16, 1
      %p167 = por %p165, %p166
      %p168 = scmp.ne.s32.totalorder %s160, %s163
      %p169 = scmp.eq.s32.totalorder %s16, 0
      %p170 = por %p168, %p169
      %p171 = scmp.ne.s32.totalorder %s160, %s163
      %p172 = scmp.eq.s32.totalorder %s21, 1
      %p173 = por %p171, %p172
      %p174 = scmp.ne.s32.totalorder %s163, %s164
      %p175 = scmp.eq.s32.totalorder %s21, 0
      %p176 = por %p174, %p175
      %p177 = scmp.ne.s32.totalorder %s163, %s164
      %p178 = scmp.eq.s32.totalorder %s22, 1
      %p179 = por %p177, %p178
      %p181 = scmp.ne.s32.totalorder %s164, %s180
      %p182 = scmp.eq.s32.totalorder %s22, 0
      %p183 = por %p181, %p182
      %p184 = scmp.le.s32.totalorder 1, %s16
      %p185 = scmp.lt.s32.totalorder %s16, 3
      %p186 = pnand %p184, %p185
      %p187 = pneg %p186
      // Predicated region
      $region9: #{tpu_custom_call.1} parent=5 // pred_check
        _
      $region10: #{tpu_custom_call.1} parent=5 // pred_check_branch
        %189 = sbr.rel (%p186) target = $region12
      $region11: #{tpu_custom_call.1} parent=5 // pred_region
        %s190 = ssub.s32 %s16, 1
        // Predicated region
        $region13: #{tpu_custom_call.1} parent=11 // pred_check
          %p191 = pneg %p82
        $region14: #{tpu_custom_call.1} parent=11 // pred_check_branch
          %193 = sbr.rel (%p191) target = $region16
        $region15: #{tpu_custom_call.1} parent=11 // pred_region
          %s194 = smul.u32 32, %s26
          %s196 = ssub.s32 2048, 2048
          %197 = vsyncadd [#allocation4], %s196
          %s198 = smul.addr %s194, 64
          %s199 = scalar_lea.hbm %s1, %s198
          %s200 = sshll.u32 [#allocation3], 4
          %s201 = int_to_ptr.vmem [resolvable:$true] %s200
          %206 = dma.hbm_to_vmem [thread:$0]  %s199, 2048, %s201, [#allocation4], 64, 64, 4
        $region16: #{tpu_custom_call.1} parent=11 // pred_fallthru
          _
        // Predicated region
        $region17: #{tpu_custom_call.1} parent=11 // pred_check
          %p207 = pneg %p129
        $region18: #{tpu_custom_call.1} parent=11 // pred_check_branch
          %209 = sbr.rel (%p207) target = $region20
        $region19: #{tpu_custom_call.1} parent=11 // pred_region
          %s211 = ssub.s32 4096, 4096
          %212 = vsyncadd [#allocation7], %s211
          %s213 = sshll.u32 [#allocation6], 4
          %s214 = int_to_ptr.vmem [resolvable:$true] %s213
          %219 = dma.hbm_to_vmem [thread:$0]  %s3, 4096, %s214, [#allocation7], 256, 256, 16
        $region20: #{tpu_custom_call.1} parent=11 // pred_fallthru
          _
        // Predicated region
        $region21: #{tpu_custom_call.1} parent=11 // pred_check
          %p220 = pneg %p150
        $region22: #{tpu_custom_call.1} parent=11 // pred_check_branch
          %222 = sbr.rel (%p220) target = $region24
        $region23: #{tpu_custom_call.1} parent=11 // pred_region
          _
        $region24: #{tpu_custom_call.1} parent=11 // pred_fallthru
          _
      $region12: #{tpu_custom_call.1} parent=5 // pred_fallthru
        _
      %p223 = scmp.lt.s32.totalorder %s16, 2
      // Predicated region
      $region25: #{tpu_custom_call.1} parent=5 // pred_check
        %p224 = pneg %p223
      $region26: #{tpu_custom_call.1} parent=5 // pred_check_branch
        %226 = sbr.rel (%p224) target = $region28
      $region27: #{tpu_custom_call.1} parent=5 // pred_region
        // Predicated region
        $region29: #{tpu_custom_call.1} parent=27 // pred_check
          %p227 = pneg %p50
        $region30: #{tpu_custom_call.1} parent=27 // pred_check_branch
          %229 = sbr.rel (%p227) target = $region32
        $region31: #{tpu_custom_call.1} parent=27 // pred_region
          %s230 = smul.u32 16, %s23
          %s231 = smul.u32 2, %s24
          %p232 = scmp.lt.s32.totalorder %s230, 31
          %s233 = scalar_select %p232, %s230, 31
          %p234 = scmp.lt.s32.totalorder %s231, 1
          %s235 = scalar_select %p234, %s231, 1
          %s236 = smul.addr %s233, 2
          %s237 = sadd.s32 %s235, %s236
          %s238 = smul.addr %s237, 4
          %s239 = scalar_lea.vmem %s0, %s238
          %s240 = smul.u32 16, %s23
          %s241 = smul.u32 2, %s24
        $region32: #{tpu_custom_call.1} parent=27 // pred_fallthru
          _
        // Predicated region
        $region33: #{tpu_custom_call.1} parent=27 // pred_check
          %p242 = pneg %p102
        $region34: #{tpu_custom_call.1} parent=27 // pred_check_branch
          %244 = sbr.rel (%p242) target = $region36
        $region35: #{tpu_custom_call.1} parent=27 // pred_region
          %s245 = smul.u32 16, %s23
          %p246 = scmp.lt.s32.totalorder %s245, 31
          %s247 = scalar_select %p246, %s245, 31
          %s248 = smul.addr %s247, 8
          %s249 = scalar_lea.vmem %s2, %s248
          %s250 = smul.u32 16, %s23
        $region36: #{tpu_custom_call.1} parent=27 // pred_fallthru
          _
      $region28: #{tpu_custom_call.1} parent=5 // pred_fallthru
        _
      %p251 = scmp.le.s32.totalorder 1, %s16
      %p252 = scmp.lt.s32.totalorder %s16, 3
      %p253 = pnand %p251, %p252
      %p254 = pneg %p253
      // Predicated region
      $region37: #{tpu_custom_call.1} parent=5 // pred_check
        _
      $region38: #{tpu_custom_call.1} parent=5 // pred_check_branch
        %256 = sbr.rel (%p253) target = $region40
      $region39: #{tpu_custom_call.1} parent=5 // pred_region
        %s257 = ssub.s32 %s16, 1
        // Predicated region
        $region41: #{tpu_custom_call.1} parent=39 // pred_check
          %p258 = pneg %p82
        $region42: #{tpu_custom_call.1} parent=39 // pred_check_branch
          %260 = sbr.rel (%p258) target = $region44
        $region43: #{tpu_custom_call.1} parent=39 // pred_region
          %261 = dma.done [#allocation4], 2048
        $region44: #{tpu_custom_call.1} parent=39 // pred_fallthru
          _
        // Predicated region
        $region45: #{tpu_custom_call.1} parent=39 // pred_check
          %p262 = pneg %p129
        $region46: #{tpu_custom_call.1} parent=39 // pred_check_branch
          %264 = sbr.rel (%p262) target = $region48
        $region47: #{tpu_custom_call.1} parent=39 // pred_region
          %265 = dma.done [#allocation7], 4096
        $region48: #{tpu_custom_call.1} parent=39 // pred_fallthru
          _
        %s266 = smul.u32 16, %s25
        %s267 = smul.u32 2, %s26
        %p268 = scmp.lt.s32.totalorder %s266, 31
        %s269 = scalar_select %p268, %s266, 31
        %p270 = scmp.lt.s32.totalorder %s267, 1
        %s271 = scalar_select %p270, %s267, 1
        %s272 = smul.addr %s269, 2
        %s273 = sadd.s32 %s271, %s272
        %s274 = smul.addr %s273, 4
        %s275 = scalar_lea.vmem %s0, %s274
        %p276 = pneg %p56
        %p277 = pneg %p53
        %p278 = pneg %p82
        %p279 = pneg %p79
        %s280 = smul.u32 16, %s25
        %p281 = scmp.lt.s32.totalorder %s280, 31
        %s282 = scalar_select %p281, %s280, 31
        %s283 = smul.addr %s282, 8
        %s284 = scalar_lea.vmem %s2, %s283
        %p285 = pneg %p108
        %p286 = pneg %p105
        %p287 = pneg %p129
        %p288 = pneg %p126
        %p289 = pneg %p150
        %p290 = pneg %p147
        %p291 = pneg %p176
        %p292 = pneg %p173
        %s293 = sand.u32 %s163, 1
        %s294 = scalar_lea.sflag [#allocation5], %s293
        %s295 = sand.u32 %s163, 1
        %s296 = smul.addr %s295, 256
        %s297 = scalar_lea.vmem [#allocation8], %s296
        %s298 = smul.u32 16, %s25
        %s299 = smul.u32 2, %s26
        %p300 = scmp.lt.s32.totalorder %s298, 31
        %s301 = scalar_select %p300, %s298, 31
        %p302 = scmp.lt.s32.totalorder %s299, 1
        %s303 = scalar_select %p302, %s299, 1
        %s304 = smul.addr %s301, 2
        %s305 = sadd.s32 %s303, %s304
        %s306 = smul.addr %s305, 4
        %s307 = scalar_lea.vmem %s0, %s306
        %s308 = smul.u32 16, %s25
        %s309 = smul.u32 2, %s26
        %s310 = smul.u32 32, %s26
        %s311 = smul.u32 16, %s25
        %p312 = scmp.lt.s32.totalorder %s311, 31
        %s313 = scalar_select %p312, %s311, 31
        %s314 = smul.addr %s313, 8
        %s315 = scalar_lea.vmem %s2, %s314
        %s316 = smul.u32 16, %s25
        %s317 = smul.u32 16, %s25
        %p319 = scmp.eq.s32.totalorder %s26, 0
        // Predicated region
        $region49: #{tpu_custom_call.1} parent=39 // pred_check
          %p320 = pneg %p319
        $region50: #{tpu_custom_call.1} parent=39 // pred_check_branch
          %322 = sbr.rel (%p320) target = $region52
        $region51: #{tpu_custom_call.1} parent=39 // pred_region
          %323 = vst [vmem:[#allocation2] sm:$0xff] 0.0
          %324 = vst [vmem:[#allocation2 + $0x8] sm:$0xff] 0.0
          %325 = vst [vmem:[#allocation2 + $0x10] sm:$0xff] 0.0
          %326 = vst [vmem:[#allocation2 + $0x18] sm:$0xff] 0.0
          %327 = vst [vmem:[#allocation2 + $0x20] sm:$0xff] 0.0
          %328 = vst [vmem:[#allocation2 + $0x28] sm:$0xff] 0.0
          %329 = vst [vmem:[#allocation2 + $0x30] sm:$0xff] 0.0
          %330 = vst [vmem:[#allocation2 + $0x38] sm:$0xff] 0.0
          %331 = vst [vmem:[#allocation2 + $0x40] sm:$0xff] 0.0
          %332 = vst [vmem:[#allocation2 + $0x48] sm:$0xff] 0.0
          %333 = vst [vmem:[#allocation2 + $0x50] sm:$0xff] 0.0
          %334 = vst [vmem:[#allocation2 + $0x58] sm:$0xff] 0.0
          %335 = vst [vmem:[#allocation2 + $0x60] sm:$0xff] 0.0
          %336 = vst [vmem:[#allocation2 + $0x68] sm:$0xff] 0.0
          %337 = vst [vmem:[#allocation2 + $0x70] sm:$0xff] 0.0
          %338 = vst [vmem:[#allocation2 + $0x78] sm:$0xff] 0.0
        $region52: #{tpu_custom_call.1} parent=39 // pred_fallthru
          _
        %v339 = vld [vmem:[#allocation2] sm:$0xff]
        %v340 = vld [vmem:[#allocation2 + $0x8] sm:$0xff]
        %v341 = vld [vmem:[#allocation2 + $0x10] sm:$0xff]
        %v342 = vld [vmem:[#allocation2 + $0x18] sm:$0xff]
        %v343 = vld [vmem:[#allocation2 + $0x20] sm:$0xff]
        %v344 = vld [vmem:[#allocation2 + $0x28] sm:$0xff]
        %v345 = vld [vmem:[#allocation2 + $0x30] sm:$0xff]
        %v346 = vld [vmem:[#allocation2 + $0x38] sm:$0xff]
        %v347 = vld [vmem:[#allocation2 + $0x40] sm:$0xff]
        %v348 = vld [vmem:[#allocation2 + $0x48] sm:$0xff]
        %v349 = vld [vmem:[#allocation2 + $0x50] sm:$0xff]
        %v350 = vld [vmem:[#allocation2 + $0x58] sm:$0xff]
        %v351 = vld [vmem:[#allocation2 + $0x60] sm:$0xff]
        %v352 = vld [vmem:[#allocation2 + $0x68] sm:$0xff]
        %v353 = vld [vmem:[#allocation2 + $0x70] sm:$0xff]
        %v354 = vld [vmem:[#allocation2 + $0x78] sm:$0xff]
        %v355 = vld [vmem:[%s307] sm:$0xff]
        %v356 = vld [vmem:[%s307 + $0x8] sm:$0xff]
        %v357 = vld [vmem:[%s307 + $0x10] sm:$0xff]
        %v358 = vld [vmem:[%s307 + $0x18] sm:$0xff]
        %v359 = vld [vmem:[%s307 + $0x20] sm:$0xff]
        %v360 = vld [vmem:[%s307 + $0x28] sm:$0xff]
        %v361 = vld [vmem:[%s307 + $0x30] sm:$0xff]
        %v362 = vld [vmem:[%s307 + $0x38] sm:$0xff]
        %v363 = vld [vmem:[%s307 + $0x40] sm:$0xff]
        %v364 = vld [vmem:[%s307 + $0x48] sm:$0xff]
        %v365 = vld [vmem:[%s307 + $0x50] sm:$0xff]
        %v366 = vld [vmem:[%s307 + $0x58] sm:$0xff]
        %v367 = vld [vmem:[%s307 + $0x60] sm:$0xff]
        %v368 = vld [vmem:[%s307 + $0x68] sm:$0xff]
        %v369 = vld [vmem:[%s307 + $0x70] sm:$0xff]
        %v370 = vld [vmem:[%s307 + $0x78] sm:$0xff]
        %v371 = vld [vmem:[#allocation3] sm:$0xf]
        %v372 = vld [vmem:[#allocation3 + $0x4] sm:$0xf]
        %v373 = vld [vmem:[#allocation3 + $0x8] sm:$0xf]
        %v374 = vld [vmem:[#allocation3 + $0xc] sm:$0xf]
        %v375 = vld [vmem:[#allocation3 + $0x10] sm:$0xf]
        %v376 = vld [vmem:[#allocation3 + $0x14] sm:$0xf]
        %v377 = vld [vmem:[#allocation3 + $0x18] sm:$0xf]
        %v378 = vld [vmem:[#allocation3 + $0x1c] sm:$0xf]
        %v379 = vld [vmem:[#allocation3 + $0x20] sm:$0xf]
        %v380 = vld [vmem:[#allocation3 + $0x24] sm:$0xf]
        %v381 = vld [vmem:[#allocation3 + $0x28] sm:$0xf]
        %v382 = vld [vmem:[#allocation3 + $0x2c] sm:$0xf]
        %v383 = vld [vmem:[#allocation3 + $0x30] sm:$0xf]
        %v384 = vld [vmem:[#allocation3 + $0x34] sm:$0xf]
        %v385 = vld [vmem:[#allocation3 + $0x38] sm:$0xf]
        %v386 = vld [vmem:[#allocation3 + $0x3c] sm:$0xf]
        %v387 = vld [vmem:[#allocation3 + $0x40] sm:$0xf]
        %v388 = vld [vmem:[#allocation3 + $0x44] sm:$0xf]
        %v389 = vld [vmem:[#allocation3 + $0x48] sm:$0xf]
        %v390 = vld [vmem:[#allocation3 + $0x4c] sm:$0xf]
        %v391 = vld [vmem:[#allocation3 + $0x50] sm:$0xf]
        %v392 = vld [vmem:[#allocation3 + $0x54] sm:$0xf]
        %v393 = vld [vmem:[#allocation3 + $0x58] sm:$0xf]
        %v394 = vld [vmem:[#allocation3 + $0x5c] sm:$0xf]
        %v395 = vld [vmem:[#allocation3 + $0x60] sm:$0xf]
        %v396 = vld [vmem:[#allocation3 + $0x64] sm:$0xf]
        %v397 = vld [vmem:[#allocation3 + $0x68] sm:$0xf]
        %v398 = vld [vmem:[#allocation3 + $0x6c] sm:$0xf]
        %v399 = vld [vmem:[#allocation3 + $0x70] sm:$0xf]
        %v400 = vld [vmem:[#allocation3 + $0x74] sm:$0xf]
        %v401 = vld [vmem:[#allocation3 + $0x78] sm:$0xf]
        %v402 = vld [vmem:[#allocation3 + $0x7c] sm:$0xf]
        %v419 = vunpack.c.l.b16 %v355
        %v420 = vunpack.c.h.b16 %v355
        %v421 = vunpack.c.l.b16 %v356
        %v422 = vunpack.c.h.b16 %v356
        %v423 = vunpack.c.l.b16 %v357
        %v424 = vunpack.c.h.b16 %v357
        %v425 = vunpack.c.l.b16 %v358
        %v426 = vunpack.c.h.b16 %v358
        %v427 = vunpack.c.l.b16 %v359
        %v428 = vunpack.c.h.b16 %v359
        %v429 = vunpack.c.l.b16 %v360
        %v430 = vunpack.c.h.b16 %v360
        %v431 = vunpack.c.l.b16 %v361
        %v432 = vunpack.c.h.b16 %v361
        %v433 = vunpack.c.l.b16 %v362
        %v434 = vunpack.c.h.b16 %v362
        %v435 = vunpack.c.l.b16 %v363
        %v436 = vunpack.c.h.b16 %v363
        %v437 = vunpack.c.l.b16 %v364
        %v438 = vunpack.c.h.b16 %v364
        %v439 = vunpack.c.l.b16 %v365
        %v440 = vunpack.c.h.b16 %v365
        %v441 = vunpack.c.l.b16 %v366
        %v442 = vunpack.c.h.b16 %v366
        %v443 = vunpack.c.l.b16 %v367
        %v444 = vunpack.c.h.b16 %v367
        %v445 = vunpack.c.l.b16 %v368
        %v446 = vunpack.c.h.b16 %v368
        %v447 = vunpack.c.l.b16 %v369
        %v448 = vunpack.c.h.b16 %v369
        %v449 = vunpack.c.l.b16 %v370
        %v450 = vunpack.c.h.b16 %v370
        %v451 = vpack.c.b16 %v421, %v419
        %v452 = vpack.c.b16 %v422, %v420
        %v453 = vpack.c.b16 %v425, %v423
        %v454 = vpack.c.b16 %v426, %v424
        %v455 = vpack.c.b16 %v429, %v427
        %v456 = vpack.c.b16 %v430, %v428
        %v457 = vpack.c.b16 %v433, %v431
        %v458 = vpack.c.b16 %v434, %v432
        %v459 = vpack.c.b16 %v437, %v435
        %v460 = vpack.c.b16 %v438, %v436
        %v461 = vpack.c.b16 %v441, %v439
        %v462 = vpack.c.b16 %v442, %v440
        %v463 = vpack.c.b16 %v445, %v443
        %v464 = vpack.c.b16 %v446, %v444
        %v465 = vpack.c.b16 %v449, %v447
        %v466 = vpack.c.b16 %v450, %v448
        %v515 = vunpack.c.l.b16 %v371
        %v516 = vunpack.c.l.b16 %v372
        %v517 = vunpack.c.l.b16 %v373
        %v518 = vunpack.c.l.b16 %v374
        %v519 = vunpack.c.l.b16 %v375
        %v520 = vunpack.c.l.b16 %v376
        %v521 = vunpack.c.l.b16 %v377
        %v522 = vunpack.c.l.b16 %v378
        %v523 = vunpack.c.l.b16 %v379
        %v524 = vunpack.c.l.b16 %v380
        %v525 = vunpack.c.l.b16 %v381
        %v526 = vunpack.c.l.b16 %v382
        %v527 = vunpack.c.l.b16 %v383
        %v528 = vunpack.c.l.b16 %v384
        %v529 = vunpack.c.l.b16 %v385
        %v530 = vunpack.c.l.b16 %v386
        %v531 = vunpack.c.l.b16 %v387
        %v532 = vunpack.c.l.b16 %v388
        %v533 = vunpack.c.l.b16 %v389
        %v534 = vunpack.c.l.b16 %v390
        %v535 = vunpack.c.l.b16 %v391
        %v536 = vunpack.c.l.b16 %v392
        %v537 = vunpack.c.l.b16 %v393
        %v538 = vunpack.c.l.b16 %v394
        %v539 = vunpack.c.l.b16 %v395
        %v540 = vunpack.c.l.b16 %v396
        %v541 = vunpack.c.l.b16 %v397
        %v542 = vunpack.c.l.b16 %v398
        %v543 = vunpack.c.l.b16 %v399
        %v544 = vunpack.c.l.b16 %v400
        %v545 = vunpack.c.l.b16 %v401
        %v546 = vunpack.c.l.b16 %v402
        %v547 = vpack.c.b16 %v516, %v515
        %v548 = vpack.c.b16 %v518, %v517
        %v549 = vpack.c.b16 %v520, %v519
        %v550 = vpack.c.b16 %v522, %v521
        %v551 = vpack.c.b16 %v524, %v523
        %v552 = vpack.c.b16 %v526, %v525
        %v553 = vpack.c.b16 %v528, %v527
        %v554 = vpack.c.b16 %v530, %v529
        %v555 = vpack.c.b16 %v532, %v531
        %v556 = vpack.c.b16 %v534, %v533
        %v557 = vpack.c.b16 %v536, %v535
        %v558 = vpack.c.b16 %v538, %v537
        %v559 = vpack.c.b16 %v540, %v539
        %v560 = vpack.c.b16 %v542, %v541
        %v561 = vpack.c.b16 %v544, %v543
        %v562 = vpack.c.b16 %v546, %v545
        %579 = vmatprep.subr.bf16.mxu0 0
        %580 = vmatpush1.bf16.msra.mxu0 %v547
        %581 = vmatprep.subr.bf16.mxu0 0
        %582 = vmatpush1.bf16.msra.mxu0 %v548
        %583 = vmatprep.subr.bf16.mxu0 0
        %584 = vmatpush1.bf16.msra.mxu0 %v549
        %585 = vmatprep.subr.bf16.mxu0 0
        %586 = vmatpush1.bf16.msra.mxu0 %v550
        %587 = vmatprep.subr.bf16.mxu0 0
        %588 = vmatpush1.bf16.msra.mxu0 %v551
        %589 = vmatprep.subr.bf16.mxu0 0
        %590 = vmatpush1.bf16.msra.mxu0 %v552
        %591 = vmatprep.subr.bf16.mxu0 0
        %592 = vmatpush1.bf16.msra.mxu0 %v553
        %593 = vmatprep.subr.bf16.mxu0 0
        %594 = vmatpush1.bf16.msra.mxu0 %v554
        %595 = vmatprep.subr.bf16.mxu0 0
        %596 = vmatpush1.bf16.msra.mxu0 %v555
        %597 = vmatprep.subr.bf16.mxu0 0
        %598 = vmatpush1.bf16.msra.mxu0 %v556
        %599 = vmatprep.subr.bf16.mxu0 0
        %600 = vmatpush1.bf16.msra.mxu0 %v557
        %601 = vmatprep.subr.bf16.mxu0 0
        %602 = vmatpush1.bf16.msra.mxu0 %v558
        %603 = vmatprep.subr.bf16.mxu0 0
        %604 = vmatpush1.bf16.msra.mxu0 %v559
        %605 = vmatprep.subr.bf16.mxu0 0
        %606 = vmatpush1.bf16.msra.mxu0 %v560
        %607 = vmatprep.subr.bf16.mxu0 0
        %608 = vmatpush1.bf16.msra.mxu0 %v561
        %609 = vmatprep.subr.bf16.mxu0 0
        %610 = vmatpush1.bf16.msra.mxu0 %v562
        %611 = vmatprep.mubr.bf16.mxu0 %v452
        %612 = vmatmul.mubr.bf16.gmra.mrb[0].mxu0 %v451
        %v613 = vpop.f32.mrb[0].mxu0
        %v614 = vadd.f32 0.0, %v613
        %v615 = vpop.f32.mrb[0].mxu0
        %v616 = vpop.f32.mrb[0].mxu0
        %v617 = vadd.f32 0.0, %v616
        %v618 = vpop.f32.mrb[0].mxu0
        %619 = vmatprep.mubr.bf16.mxu0 %v454
        %620 = vmatmul.mubr.bf16.gmra.mrb[0].mxu0 %v453
        %v621 = vpop.f32.mrb[0].mxu0
        %v622 = vadd.f32 0.0, %v621
        %v623 = vpop.f32.mrb[0].mxu0
        %v624 = vpop.f32.mrb[0].mxu0
        %v625 = vadd.f32 0.0, %v624
        %v626 = vpop.f32.mrb[0].mxu0
        %627 = vmatprep.mubr.bf16.mxu0 %v456
        %628 = vmatmul.mubr.bf16.gmra.mrb[0].mxu0 %v455
        %v629 = vpop.f32.mrb[0].mxu0
        %v630 = vadd.f32 0.0, %v629
        %v631 = vpop.f32.mrb[0].mxu0
        %v632 = vpop.f32.mrb[0].mxu0
        %v633 = vadd.f32 0.0, %v632
        %v634 = vpop.f32.mrb[0].mxu0
        %635 = vmatprep.mubr.bf16.mxu0 %v458
        %636 = vmatmul.mubr.bf16.gmra.mrb[0].mxu0 %v457
        %v637 = vpop.f32.mrb[0].mxu0
        %v638 = vadd.f32 0.0, %v637
        %v639 = vpop.f32.mrb[0].mxu0
        %v640 = vpop.f32.mrb[0].mxu0
        %v641 = vadd.f32 0.0, %v640
        %v642 = vpop.f32.mrb[0].mxu0
        %643 = vmatprep.mubr.bf16.mxu0 %v460
        %644 = vmatmul.mubr.bf16.gmra.mrb[0].mxu0 %v459
        %v645 = vpop.f32.mrb[0].mxu0
        %v646 = vadd.f32 0.0, %v645
        %v647 = vpop.f32.mrb[0].mxu0
        %v648 = vpop.f32.mrb[0].mxu0
        %v649 = vadd.f32 0.0, %v648
        %v650 = vpop.f32.mrb[0].mxu0
        %651 = vmatprep.mubr.bf16.mxu0 %v462
        %652 = vmatmul.mubr.bf16.gmra.mrb[0].mxu0 %v461
        %v653 = vpop.f32.mrb[0].mxu0
        %v654 = vadd.f32 0.0, %v653
        %v655 = vpop.f32.mrb[0].mxu0
        %v656 = vpop.f32.mrb[0].mxu0
        %v657 = vadd.f32 0.0, %v656
        %v658 = vpop.f32.mrb[0].mxu0
        %659 = vmatprep.mubr.bf16.mxu0 %v464
        %660 = vmatmul.mubr.bf16.gmra.mrb[0].mxu0 %v463
        %v661 = vpop.f32.mrb[0].mxu0
        %v662 = vadd.f32 0.0, %v661
        %v663 = vpop.f32.mrb[0].mxu0
        %v664 = vpop.f32.mrb[0].mxu0
        %v665 = vadd.f32 0.0, %v664
        %v666 = vpop.f32.mrb[0].mxu0
        %667 = vmatprep.mubr.bf16.mxu0 %v466
        %668 = vmatmul.mubr.bf16.gmra.mrb[0].mxu0 %v465
        %v669 = vpop.f32.mrb[0].mxu0
        %v670 = vadd.f32 0.0, %v669
        %v671 = vpop.f32.mrb[0].mxu0
        %v672 = vpop.f32.mrb[0].mxu0
        %v673 = vadd.f32 0.0, %v672
        %v674 = vpop.f32.mrb[0].mxu0
        %675 = vdwg.mxu0
        %v676 = vadd.f32 %v339, %v614
        %v677 = vadd.f32 %v340, %v617
        %v678 = vadd.f32 %v341, %v622
        %v679 = vadd.f32 %v342, %v625
        %v680 = vadd.f32 %v343, %v630
        %v681 = vadd.f32 %v344, %v633
        %v682 = vadd.f32 %v345, %v638
        %v683 = vadd.f32 %v346, %v641
        %v684 = vadd.f32 %v347, %v646
        %v685 = vadd.f32 %v348, %v649
        %v686 = vadd.f32 %v349, %v654
        %v687 = vadd.f32 %v350, %v657
        %v688 = vadd.f32 %v351, %v662
        %v689 = vadd.f32 %v352, %v665
        %v690 = vadd.f32 %v353, %v670
        %v691 = vadd.f32 %v354, %v673
        %692 = vst [vmem:[#allocation2] sm:$0xff] %v676
        %693 = vst [vmem:[#allocation2 + $0x8] sm:$0xff] %v677
        %694 = vst [vmem:[#allocation2 + $0x10] sm:$0xff] %v678
        %695 = vst [vmem:[#allocation2 + $0x18] sm:$0xff] %v679
        %696 = vst [vmem:[#allocation2 + $0x20] sm:$0xff] %v680
        %697 = vst [vmem:[#allocation2 + $0x28] sm:$0xff] %v681
        %698 = vst [vmem:[#allocation2 + $0x30] sm:$0xff] %v682
        %699 = vst [vmem:[#allocation2 + $0x38] sm:$0xff] %v683
        %700 = vst [vmem:[#allocation2 + $0x40] sm:$0xff] %v684
        %701 = vst [vmem:[#allocation2 + $0x48] sm:$0xff] %v685
        %702 = vst [vmem:[#allocation2 + $0x50] sm:$0xff] %v686
        %703 = vst [vmem:[#allocation2 + $0x58] sm:$0xff] %v687
        %704 = vst [vmem:[#allocation2 + $0x60] sm:$0xff] %v688
        %705 = vst [vmem:[#allocation2 + $0x68] sm:$0xff] %v689
        %706 = vst [vmem:[#allocation2 + $0x70] sm:$0xff] %v690
        %707 = vst [vmem:[#allocation2 + $0x78] sm:$0xff] %v691
        // Predicated region
        $region53: #{tpu_custom_call.1} parent=39 // pred_check
          %p708 = pneg %p319
        $region54: #{tpu_custom_call.1} parent=39 // pred_check_branch
          %710 = sbr.rel (%p708) target = $region56
        $region55: #{tpu_custom_call.1} parent=39 // pred_region
          %v711 = vld [vmem:[#allocation2] sm:$0xff]
          %v712 = vld [vmem:[#allocation2 + $0x8] sm:$0xff]
          %v713 = vld [vmem:[#allocation2 + $0x10] sm:$0xff]
          %v714 = vld [vmem:[#allocation2 + $0x18] sm:$0xff]
          %v715 = vld [vmem:[#allocation2 + $0x20] sm:$0xff]
          %v716 = vld [vmem:[#allocation2 + $0x28] sm:$0xff]
          %v717 = vld [vmem:[#allocation2 + $0x30] sm:$0xff]
          %v718 = vld [vmem:[#allocation2 + $0x38] sm:$0xff]
          %v719 = vld [vmem:[#allocation2 + $0x40] sm:$0xff]
          %v720 = vld [vmem:[#allocation2 + $0x48] sm:$0xff]
          %v721 = vld [vmem:[#allocation2 + $0x50] sm:$0xff]
          %v722 = vld [vmem:[#allocation2 + $0x58] sm:$0xff]
          %v723 = vld [vmem:[#allocation2 + $0x60] sm:$0xff]
          %v724 = vld [vmem:[#allocation2 + $0x68] sm:$0xff]
          %v725 = vld [vmem:[#allocation2 + $0x70] sm:$0xff]
          %v726 = vld [vmem:[#allocation2 + $0x78] sm:$0xff]
          %v727 = vld [vmem:[%s315] sm:$0xff]
          %v728 = vld [vmem:[%s315 + $0x8] sm:$0xff]
          %v729 = vld [vmem:[%s315 + $0x10] sm:$0xff]
          %v730 = vld [vmem:[%s315 + $0x18] sm:$0xff]
          %v731 = vld [vmem:[%s315 + $0x20] sm:$0xff]
          %v732 = vld [vmem:[%s315 + $0x28] sm:$0xff]
          %v733 = vld [vmem:[%s315 + $0x30] sm:$0xff]
          %v734 = vld [vmem:[%s315 + $0x38] sm:$0xff]
          %v735 = vld [vmem:[%s315 + $0x40] sm:$0xff]
          %v736 = vld [vmem:[%s315 + $0x48] sm:$0xff]
          %v737 = vld [vmem:[%s315 + $0x50] sm:$0xff]
          %v738 = vld [vmem:[%s315 + $0x58] sm:$0xff]
          %v739 = vld [vmem:[%s315 + $0x60] sm:$0xff]
          %v740 = vld [vmem:[%s315 + $0x68] sm:$0xff]
          %v741 = vld [vmem:[%s315 + $0x70] sm:$0xff]
          %v742 = vld [vmem:[%s315 + $0x78] sm:$0xff]
          %744 = vset.pattern.permute.xlu0 0
          %745 = vperm.xlu0 %744, %v727
          %v746 = vpop.permute.xlu0 %745
          %749 = vset.pattern.permute.xlu0 0
          %750 = vperm.xlu0 %749, %v728
          %v751 = vpop.permute.xlu0 %750
          %754 = vset.pattern.permute.xlu0 0
          %755 = vperm.xlu0 %754, %v729
          %v756 = vpop.permute.xlu0 %755
          %759 = vset.pattern.permute.xlu0 0
          %760 = vperm.xlu0 %759, %v730
          %v761 = vpop.permute.xlu0 %760
          %764 = vset.pattern.permute.xlu0 0
          %765 = vperm.xlu0 %764, %v731
          %v766 = vpop.permute.xlu0 %765
          %769 = vset.pattern.permute.xlu0 0
          %770 = vperm.xlu0 %769, %v732
          %v771 = vpop.permute.xlu0 %770
          %774 = vset.pattern.permute.xlu0 0
          %775 = vperm.xlu0 %774, %v733
          %v776 = vpop.permute.xlu0 %775
          %779 = vset.pattern.permute.xlu0 0
          %780 = vperm.xlu0 %779, %v734
          %v781 = vpop.permute.xlu0 %780
          %784 = vset.pattern.permute.xlu0 0
          %785 = vperm.xlu0 %784, %v735
          %v786 = vpop.permute.xlu0 %785
          %789 = vset.pattern.permute.xlu0 0
          %790 = vperm.xlu0 %789, %v736
          %v791 = vpop.permute.xlu0 %790
          %794 = vset.pattern.permute.xlu0 0
          %795 = vperm.xlu0 %794, %v737
          %v796 = vpop.permute.xlu0 %795
          %799 = vset.pattern.permute.xlu0 0
          %800 = vperm.xlu0 %799, %v738
          %v801 = vpop.permute.xlu0 %800
          %804 = vset.pattern.permute.xlu0 0
          %805 = vperm.xlu0 %804, %v739
          %v806 = vpop.permute.xlu0 %805
          %809 = vset.pattern.permute.xlu0 0
          %810 = vperm.xlu0 %809, %v740
          %v811 = vpop.permute.xlu0 %810
          %814 = vset.pattern.permute.xlu0 0
          %815 = vperm.xlu0 %814, %v741
          %v816 = vpop.permute.xlu0 %815
          %819 = vset.pattern.permute.xlu0 0
          %820 = vperm.xlu0 %819, %v742
          %v821 = vpop.permute.xlu0 %820
          %v823 = vmul.f32 %v711, %v746
          %v824 = vmul.f32 %v712, %v751
          %v825 = vmul.f32 %v713, %v756
          %v826 = vmul.f32 %v714, %v761
          %v827 = vmul.f32 %v715, %v766
          %v828 = vmul.f32 %v716, %v771
          %v829 = vmul.f32 %v717, %v776
          %v830 = vmul.f32 %v718, %v781
          %v831 = vmul.f32 %v719, %v786
          %v832 = vmul.f32 %v720, %v791
          %v833 = vmul.f32 %v721, %v796
          %v834 = vmul.f32 %v722, %v801
          %v835 = vmul.f32 %v723, %v806
          %v836 = vmul.f32 %v724, %v811
          %v837 = vmul.f32 %v725, %v816
          %v838 = vmul.f32 %v726, %v821
          %v839 = vld [vmem:[#allocation6] sm:$0xff]
          %v840 = vld [vmem:[#allocation6 + $0x8] sm:$0xff]
          %v841 = vld [vmem:[#allocation6 + $0x10] sm:$0xff]
          %v842 = vld [vmem:[#allocation6 + $0x18] sm:$0xff]
          %v843 = vld [vmem:[#allocation6 + $0x20] sm:$0xff]
          %v844 = vld [vmem:[#allocation6 + $0x28] sm:$0xff]
          %v845 = vld [vmem:[#allocation6 + $0x30] sm:$0xff]
          %v846 = vld [vmem:[#allocation6 + $0x38] sm:$0xff]
          %v847 = vld [vmem:[#allocation6 + $0x40] sm:$0xff]
          %v848 = vld [vmem:[#allocation6 + $0x48] sm:$0xff]
          %v849 = vld [vmem:[#allocation6 + $0x50] sm:$0xff]
          %v850 = vld [vmem:[#allocation6 + $0x58] sm:$0xff]
          %v851 = vld [vmem:[#allocation6 + $0x60] sm:$0xff]
          %v852 = vld [vmem:[#allocation6 + $0x68] sm:$0xff]
          %v853 = vld [vmem:[#allocation6 + $0x70] sm:$0xff]
          %v854 = vld [vmem:[#allocation6 + $0x78] sm:$0xff]
          %v855 = vld [vmem:[#allocation6 + $0x80] sm:$0xff]
          %v856 = vld [vmem:[#allocation6 + $0x88] sm:$0xff]
          %v857 = vld [vmem:[#allocation6 + $0x90] sm:$0xff]
          %v858 = vld [vmem:[#allocation6 + $0x98] sm:$0xff]
          %v859 = vld [vmem:[#allocation6 + $0xa0] sm:$0xff]
          %v860 = vld [vmem:[#allocation6 + $0xa8] sm:$0xff]
          %v861 = vld [vmem:[#allocation6 + $0xb0] sm:$0xff]
          %v862 = vld [vmem:[#allocation6 + $0xb8] sm:$0xff]
          %v863 = vld [vmem:[#allocation6 + $0xc0] sm:$0xff]
          %v864 = vld [vmem:[#allocation6 + $0xc8] sm:$0xff]
          %v865 = vld [vmem:[#allocation6 + $0xd0] sm:$0xff]
          %v866 = vld [vmem:[#allocation6 + $0xd8] sm:$0xff]
          %v867 = vld [vmem:[#allocation6 + $0xe0] sm:$0xff]
          %v868 = vld [vmem:[#allocation6 + $0xe8] sm:$0xff]
          %v869 = vld [vmem:[#allocation6 + $0xf0] sm:$0xff]
          %v870 = vld [vmem:[#allocation6 + $0xf8] sm:$0xff]
          %v871 = vld [vmem:[%s4] sm:$0x3]
          %v873 = vlaneseq
          %v874 = vshrl.u32 %v873, 7
          %v875 = vsub.s32 0, %v874
          %v876 = vrot.slane %v871, %v875
          %v877 = vlaneseq
          %v878 = vshrl.u32 %v877, 7
          %v879 = vsub.s32 1, %v878
          %v880 = vrot.slane %v871, %v879
          %883 = vmatprep.subr.mxu0 %v840
          %884 = vmatpush1.msra.mxu0 %v839
          %885 = vmatprep.subr.mxu0 %v842
          %886 = vmatpush1.msra.mxu0 %v841
          %887 = vmatprep.subr.mxu0 %v844
          %888 = vmatpush1.msra.mxu0 %v843
          %889 = vmatprep.subr.mxu0 %v846
          %890 = vmatpush1.msra.mxu0 %v845
          %891 = vmatprep.subr.mxu0 %v848
          %892 = vmatpush1.msra.mxu0 %v847
          %893 = vmatprep.subr.mxu0 %v850
          %894 = vmatpush1.msra.mxu0 %v849
          %895 = vmatprep.subr.mxu0 %v852
          %896 = vmatpush1.msra.mxu0 %v851
          %897 = vmatprep.subr.mxu0 %v854
          %898 = vmatpush1.msra.mxu0 %v853
          %899 = vmatprep.subr.mxu0 %v856
          %900 = vmatpush1.msra.mxu0 %v855
          %901 = vmatprep.subr.mxu0 %v858
          %902 = vmatpush1.msra.mxu0 %v857
          %903 = vmatprep.subr.mxu0 %v860
          %904 = vmatpush1.msra.mxu0 %v859
          %905 = vmatprep.subr.mxu0 %v862
          %906 = vmatpush1.msra.mxu0 %v861
          %907 = vmatprep.subr.mxu0 %v864
          %908 = vmatpush1.msra.mxu0 %v863
          %909 = vmatprep.subr.mxu0 %v866
          %910 = vmatpush1.msra.mxu0 %v865
          %911 = vmatprep.subr.mxu0 %v868
          %912 = vmatpush1.msra.mxu0 %v867
          %913 = vmatprep.subr.mxu0 %v870
          %914 = vmatpush1.msra.mxu0 %v869
          %915 = vmatprep.subr.mxu0 0.0
          %916 = vmatpush1.msra.mxu0 0.0
          %917 = vmatprep.subr.mxu0 0.0
          %918 = vmatpush1.msra.mxu0 0.0
          %919 = vmatprep.subr.mxu0 0.0
          %920 = vmatpush1.msra.mxu0 0.0
          %921 = vmatprep.subr.mxu0 0.0
          %922 = vmatpush1.msra.mxu0 0.0
          %923 = vmatprep.subr.mxu0 0.0
          %924 = vmatpush1.msra.mxu0 0.0
          %925 = vmatprep.subr.mxu0 0.0
          %926 = vmatpush1.msra.mxu0 0.0
          %927 = vmatprep.subr.mxu0 0.0
          %928 = vmatpush1.msra.mxu0 0.0
          %929 = vmatprep.subr.mxu0 0.0
          %930 = vmatpush1.msra.mxu0 0.0
          %931 = vmatprep.subr.mxu0 0.0
          %932 = vmatpush1.msra.mxu0 0.0
          %933 = vmatprep.subr.mxu0 0.0
          %934 = vmatpush1.msra.mxu0 0.0
          %935 = vmatprep.subr.mxu0 0.0
          %936 = vmatpush1.msra.mxu0 0.0
          %937 = vmatprep.subr.mxu0 0.0
          %938 = vmatpush1.msra.mxu0 0.0
          %939 = vmatprep.subr.mxu0 0.0
          %940 = vmatpush1.msra.mxu0 0.0
          %941 = vmatprep.subr.mxu0 0.0
          %942 = vmatpush1.msra.mxu0 0.0
          %943 = vmatprep.subr.mxu0 0.0
          %944 = vmatpush1.msra.mxu0 0.0
          %945 = vmatprep.subr.mxu0 0.0
          %946 = vmatpush1.msra.mxu0 0.0
          %947 = vmatprep.mubr.f32.mxu0 0.0
          %948 = vmatmul.mubr.f32.gmra.mrb[0].mxu0 %v823
          %v949 = vpop.f32.mrb[0].mxu0
          %v950 = vadd.f32 %v876, %v949
          %v951 = vpop.f32.mrb[0].mxu0
          %v952 = vadd.f32 %v880, %v951
          %953 = vmatprep.mubr.f32.mxu0 0.0
          %954 = vmatmul.mubr.f32.gmra.mrb[0].mxu0 %v824
          %v955 = vpop.f32.mrb[0].mxu0
          %v956 = vadd.f32 %v876, %v955
          %v957 = vpop.f32.mrb[0].mxu0
          %v958 = vadd.f32 %v880, %v957
          %959 = vmatprep.mubr.f32.mxu0 0.0
          %960 = vmatmul.mubr.f32.gmra.mrb[0].mxu0 %v825
          %v961 = vpop.f32.mrb[0].mxu0
          %v962 = vadd.f32 %v876, %v961
          %v963 = vpop.f32.mrb[0].mxu0
          %v964 = vadd.f32 %v880, %v963
          %965 = vmatprep.mubr.f32.mxu0 0.0
          %966 = vmatmul.mubr.f32.gmra.mrb[0].mxu0 %v826
          %v967 = vpop.f32.mrb[0].mxu0
          %v968 = vadd.f32 %v876, %v967
          %v969 = vpop.f32.mrb[0].mxu0
          %v970 = vadd.f32 %v880, %v969
          %971 = vmatprep.mubr.f32.mxu0 0.0
          %972 = vmatmul.mubr.f32.gmra.mrb[0].mxu0 %v827
          %v973 = vpop.f32.mrb[0].mxu0
          %v974 = vadd.f32 %v876, %v973
          %v975 = vpop.f32.mrb[0].mxu0
          %v976 = vadd.f32 %v880, %v975
          %977 = vmatprep.mubr.f32.mxu0 0.0
          %978 = vmatmul.mubr.f32.gmra.mrb[0].mxu0 %v828
          %v979 = vpop.f32.mrb[0].mxu0
          %v980 = vadd.f32 %v876, %v979
          %v981 = vpop.f32.mrb[0].mxu0
          %v982 = vadd.f32 %v880, %v981
          %983 = vmatprep.mubr.f32.mxu0 0.0
          %984 = vmatmul.mubr.f32.gmra.mrb[0].mxu0 %v829
          %v985 = vpop.f32.mrb[0].mxu0
          %v986 = vadd.f32 %v876, %v985
          %v987 = vpop.f32.mrb[0].mxu0
          %v988 = vadd.f32 %v880, %v987
          %989 = vmatprep.mubr.f32.mxu0 0.0
          %990 = vmatmul.mubr.f32.gmra.mrb[0].mxu0 %v830
          %v991 = vpop.f32.mrb[0].mxu0
          %v992 = vadd.f32 %v876, %v991
          %v993 = vpop.f32.mrb[0].mxu0
          %v994 = vadd.f32 %v880, %v993
          %995 = vmatprep.mubr.f32.mxu0 0.0
          %996 = vmatmul.mubr.f32.gmra.mrb[0].mxu0 %v831
          %v997 = vpop.f32.mrb[0].mxu0
          %v998 = vadd.f32 %v876, %v997
          %v999 = vpop.f32.mrb[0].mxu0
          %v1000 = vadd.f32 %v880, %v999
          %1001 = vmatprep.mubr.f32.mxu0 0.0
          %1002 = vmatmul.mubr.f32.gmra.mrb[0].mxu0 %v832
          %v1003 = vpop.f32.mrb[0].mxu0
          %v1004 = vadd.f32 %v876, %v1003
          %v1005 = vpop.f32.mrb[0].mxu0
          %v1006 = vadd.f32 %v880, %v1005
          %1007 = vmatprep.mubr.f32.mxu0 0.0
          %1008 = vmatmul.mubr.f32.gmra.mrb[0].mxu0 %v833
          %v1009 = vpop.f32.mrb[0].mxu0
          %v1010 = vadd.f32 %v876, %v1009
          %v1011 = vpop.f32.mrb[0].mxu0
          %v1012 = vadd.f32 %v880, %v1011
          %1013 = vmatprep.mubr.f32.mxu0 0.0
          %1014 = vmatmul.mubr.f32.gmra.mrb[0].mxu0 %v834
          %v1015 = vpop.f32.mrb[0].mxu0
          %v1016 = vadd.f32 %v876, %v1015
          %v1017 = vpop.f32.mrb[0].mxu0
          %v1018 = vadd.f32 %v880, %v1017
          %1019 = vmatprep.mubr.f32.mxu0 0.0
          %1020 = vmatmul.mubr.f32.gmra.mrb[0].mxu0 %v835
          %v1021 = vpop.f32.mrb[0].mxu0
          %v1022 = vadd.f32 %v876, %v1021
          %v1023 = vpop.f32.mrb[0].mxu0
          %v1024 = vadd.f32 %v880, %v1023
          %1025 = vmatprep.mubr.f32.mxu0 0.0
          %1026 = vmatmul.mubr.f32.gmra.mrb[0].mxu0 %v836
          %v1027 = vpop.f32.mrb[0].mxu0
          %v1028 = vadd.f32 %v876, %v1027
          %v1029 = vpop.f32.mrb[0].mxu0
          %v1030 = vadd.f32 %v880, %v1029
          %1031 = vmatprep.mubr.f32.mxu0 0.0
          %1032 = vmatmul.mubr.f32.gmra.mrb[0].mxu0 %v837
          %v1033 = vpop.f32.mrb[0].mxu0
          %v1034 = vadd.f32 %v876, %v1033
          %v1035 = vpop.f32.mrb[0].mxu0
          %v1036 = vadd.f32 %v880, %v1035
          %1037 = vmatprep.mubr.f32.mxu0 0.0
          %1038 = vmatmul.mubr.f32.gmra.mrb[0].mxu0 %v838
          %v1039 = vpop.f32.mrb[0].mxu0
          %v1040 = vadd.f32 %v876, %v1039
          %v1041 = vpop.f32.mrb[0].mxu0
          %v1042 = vadd.f32 %v880, %v1041
          %1043 = vdwg.mxu0
          %v1044 = vmax.f32 %v950, 0.0
          %v1045 = vmax.f32 %v952, 0.0
          %v1046 = vmax.f32 %v956, 0.0
          %v1047 = vmax.f32 %v958, 0.0
          %v1048 = vmax.f32 %v962, 0.0
          %v1049 = vmax.f32 %v964, 0.0
          %v1050 = vmax.f32 %v968, 0.0
          %v1051 = vmax.f32 %v970, 0.0
          %v1052 = vmax.f32 %v974, 0.0
          %v1053 = vmax.f32 %v976, 0.0
          %v1054 = vmax.f32 %v980, 0.0
          %v1055 = vmax.f32 %v982, 0.0
          %v1056 = vmax.f32 %v986, 0.0
          %v1057 = vmax.f32 %v988, 0.0
          %v1058 = vmax.f32 %v992, 0.0
          %v1059 = vmax.f32 %v994, 0.0
          %v1060 = vmax.f32 %v998, 0.0
          %v1061 = vmax.f32 %v1000, 0.0
          %v1062 = vmax.f32 %v1004, 0.0
          %v1063 = vmax.f32 %v1006, 0.0
          %v1064 = vmax.f32 %v1010, 0.0
          %v1065 = vmax.f32 %v1012, 0.0
          %v1066 = vmax.f32 %v1016, 0.0
          %v1067 = vmax.f32 %v1018, 0.0
          %v1068 = vmax.f32 %v1022, 0.0
          %v1069 = vmax.f32 %v1024, 0.0
          %v1070 = vmax.f32 %v1028, 0.0
          %v1071 = vmax.f32 %v1030, 0.0
          %v1072 = vmax.f32 %v1034, 0.0
          %v1073 = vmax.f32 %v1036, 0.0
          %v1074 = vmax.f32 %v1040, 0.0
          %v1075 = vmax.f32 %v1042, 0.0
          %1076 = vst [vmem:[%s297] sm:$0xff] %v1044
          %1077 = vst [vmem:[%s297 + $0x8] sm:$0xff] %v1045
          %1078 = vst [vmem:[%s297 + $0x10] sm:$0xff] %v1046
          %1079 = vst [vmem:[%s297 + $0x18] sm:$0xff] %v1047
          %1080 = vst [vmem:[%s297 + $0x20] sm:$0xff] %v1048
          %1081 = vst [vmem:[%s297 + $0x28] sm:$0xff] %v1049
          %1082 = vst [vmem:[%s297 + $0x30] sm:$0xff] %v1050
          %1083 = vst [vmem:[%s297 + $0x38] sm:$0xff] %v1051
          %1084 = vst [vmem:[%s297 + $0x40] sm:$0xff] %v1052
          %1085 = vst [vmem:[%s297 + $0x48] sm:$0xff] %v1053
          %1086 = vst [vmem:[%s297 + $0x50] sm:$0xff] %v1054
          %1087 = vst [vmem:[%s297 + $0x58] sm:$0xff] %v1055
          %1088 = vst [vmem:[%s297 + $0x60] sm:$0xff] %v1056
          %1089 = vst [vmem:[%s297 + $0x68] sm:$0xff] %v1057
          %1090 = vst [vmem:[%s297 + $0x70] sm:$0xff] %v1058
          %1091 = vst [vmem:[%s297 + $0x78] sm:$0xff] %v1059
          %1092 = vst [vmem:[%s297 + $0x80] sm:$0xff] %v1060
          %1093 = vst [vmem:[%s297 + $0x88] sm:$0xff] %v1061
          %1094 = vst [vmem:[%s297 + $0x90] sm:$0xff] %v1062
          %1095 = vst [vmem:[%s297 + $0x98] sm:$0xff] %v1063
          %1096 = vst [vmem:[%s297 + $0xa0] sm:$0xff] %v1064
          %1097 = vst [vmem:[%s297 + $0xa8] sm:$0xff] %v1065
          %1098 = vst [vmem:[%s297 + $0xb0] sm:$0xff] %v1066
          %1099 = vst [vmem:[%s297 + $0xb8] sm:$0xff] %v1067
          %1100 = vst [vmem:[%s297 + $0xc0] sm:$0xff] %v1068
          %1101 = vst [vmem:[%s297 + $0xc8] sm:$0xff] %v1069
          %1102 = vst [vmem:[%s297 + $0xd0] sm:$0xff] %v1070
          %1103 = vst [vmem:[%s297 + $0xd8] sm:$0xff] %v1071
          %1104 = vst [vmem:[%s297 + $0xe0] sm:$0xff] %v1072
          %1105 = vst [vmem:[%s297 + $0xe8] sm:$0xff] %v1073
          %1106 = vst [vmem:[%s297 + $0xf0] sm:$0xff] %v1074
          %1107 = vst [vmem:[%s297 + $0xf8] sm:$0xff] %v1075
        $region56: #{tpu_custom_call.1} parent=39 // pred_fallthru
          _
        %s1108 = sand.u32 %s163, 1
        %s1109 = scalar_lea.sflag [#allocation5], %s1108
        %s1110 = sand.u32 %s163, 1
        %s1111 = smul.addr %s1110, 256
        %s1112 = scalar_lea.vmem [#allocation8], %s1111
        // Predicated region
        $region57: #{tpu_custom_call.1} parent=39 // pred_check
          %p1113 = pneg %p173
        $region58: #{tpu_custom_call.1} parent=39 // pred_check_branch
          %1115 = sbr.rel (%p1113) target = $region60
        $region59: #{tpu_custom_call.1} parent=39 // pred_region
          %s1116 = smul.u32 16, %s25
          %s1118 = ssub.s32 4096, 4096
          %1119 = vsyncadd %s1109, %s1118
          %s1120 = smul.addr %s1116, 2
          %s1121 = smul.addr %s1120, 128
          %s1122 = scalar_lea.hbm %s5, %s1121
          %s1123 = sshll.u32 %s1112, 4
          %s1124 = int_to_ptr.vmem [resolvable:$true] %s1123
          %1129 = dma.vmem_to_hbm [thread:$0]  %s1124, 4096, %s1122, %s1109, 256, 256, 16
        $region60: #{tpu_custom_call.1} parent=39 // pred_fallthru
          _
      $region40: #{tpu_custom_call.1} parent=5 // pred_fallthru
        _
      %p1130 = scmp.le.s32.totalorder 2, %s16
      // Predicated region
      $region61: #{tpu_custom_call.1} parent=5 // pred_check
        %p1131 = pneg %p1130
      $region62: #{tpu_custom_call.1} parent=5 // pred_check_branch
        %1133 = sbr.rel (%p1131) target = $region64
      $region63: #{tpu_custom_call.1} parent=5 // pred_region
        %s1134 = ssub.s32 %s16, 2
        // Predicated region
        $region65: #{tpu_custom_call.1} parent=63 // pred_check
          %p1135 = pneg %p179
        $region66: #{tpu_custom_call.1} parent=63 // pred_check_branch
          %1137 = sbr.rel (%p1135) target = $region68
        $region67: #{tpu_custom_call.1} parent=63 // pred_region
          %s1138 = sand.u32 %s164, 1
          %s1139 = scalar_lea.sflag [#allocation5], %s1138
          %s1140 = sand.u32 %s164, 1
          %s1141 = smul.addr %s1140, 256
          %s1142 = scalar_lea.vmem [#allocation8], %s1141
          %1143 = dma.done %s1139, 4096
        $region68: #{tpu_custom_call.1} parent=63 // pred_fallthru
          _
      $region64: #{tpu_custom_call.1} parent=5 // pred_fallthru
        _
    $region6: #{tpu_custom_call.1} parent=1 // loop_footer
      %s20 = sadd.s32 1, %s16
    $region7: #{tpu_custom_call.1} parent=1 // loop_footer_branch
      %15 = sbr.rel target = $region3
    $region8: #{tpu_custom_call.1} parent=1 // loop_exit
      _
    %1144 = vsyncpa [#allocation4], 1
    %s1145 = scalar_lea.sflag [#allocation4], 1
    %1146 = vsyncpa %s1145, 1
    %1147 = vsyncpa [#allocation7], 1
    %1148 = vsyncpa [#allocation5], 1
    %s1149 = scalar_lea.sflag [#allocation5], 1
    %1150 = vsyncpa %s1149, 1

</llo_original>
